<compile_context>
chip_gen: v7x
topology: tpu7x:2x2x1
jax: 0.10.0
libtpu: 0.0.40
codegen_flags: <defaults>
</compile_context>

<pallas_src>
import math

import jax
import jax.numpy as jnp
from jax.experimental import pallas as pl
from jax.experimental.pallas import tpu as pltpu


def _round_up(a, b):
    return ((a + b - 1) // b) * b


def _sublane_rows(dtype):
    # Rows per sublane tile: 8 for 32-bit, 16 for bf16/f16, 32 for int8/fp8.
    return 8 * (4 // jnp.dtype(dtype).itemsize)


def _choose_pack(d_in, d_hidden, d_out, itemsize, max_weight_bytes=16 << 20):
    """Pack factor P: smallest P with (P*d_out) % 128 == 0 (lane-dense output
    stores), capped so the block-diagonal weights stay comfortably VMEM-resident."""
    p = 128 // math.gcd(d_out, 128)
    # TODO(synk): if this cap ever triggers, padding d_out (keeping lane density)
    # beats shrinking P; not reachable at these layer sizes.
    while p > 1 and p * p * max(d_in * d_hidden, d_hidden * d_out) * itemsize > max_weight_bytes:
        p //= 2
    return max(p, 1)


def _mlp_kernel(x_ref, w1_ref, b1_ref, w2_ref, b2_ref, o_ref):
    # One lane-dense slab row packs P edge rows; w1/w2 are the matching
    # block-diagonal weights, so per edge row this is exactly
    #   y = relu(x @ W1^T + b1) @ W2^T + b2.
    x = x_ref[...].astype(w1_ref.dtype)               # bf16 MXU operands if requested
    h = jnp.dot(x, w1_ref[...], preferred_element_type=jnp.float32)
    h = jnp.maximum(h + b1_ref[...], 0.0)             # bias + ReLU in f32 (VPU)
    y = jnp.dot(h.astype(w2_ref.dtype), w2_ref[...],
                preferred_element_type=jnp.float32)
    o_ref[...] = (y + b2_ref[...]).astype(o_ref.dtype)


def pack_edge_mlp1_params(w1_t, b1, w2_t, b2, *, compute_dtype=None):
    """Expand (W1.T, b1, W2.T, b2) to lane-dense block-diagonal form.
    Call once at weight-load time (hoisted out of the per-step hot path)."""
    d_in, d_hidden = w1_t.shape
    d_out = w2_t.shape[1]
    wdt = compute_dtype if compute_dtype is not None else w1_t.dtype
    p = _choose_pack(d_in, d_hidden, d_out, jnp.dtype(wdt).itemsize)
    eye = jnp.eye(p, dtype=wdt)
    w1_bd = jnp.kron(eye, w1_t.astype(wdt))                         # (P*D_in, P*H)
    w2_bd = jnp.kron(eye, w2_t.astype(wdt))                         # (P*H, P*D_out)
    b1_bd = jnp.tile(b1.astype(jnp.float32), p).reshape(1, p * d_hidden)
    b2_bd = jnp.tile(b2.astype(jnp.float32), p).reshape(1, p * d_out)
    return dict(pack=p, d_in=d_in, d_hidden=d_hidden, d_out=d_out,
                w1_bd=w1_bd, b1_bd=b1_bd, w2_bd=w2_bd, b2_bd=b2_bd)


def _pick_grid(rows, requested_rows, align):
    """Big tiles to amortise per-step overhead, but >= 2 grid steps whenever
    possible (v7x megacore).  Tile height is a multiple of `align` unless the
    single block covers the whole array (full-extent dims are always legal)."""
    if rows <= 2 * align:
        return rows, 1
    n_target = max(pl.cdiv(rows, max(requested_rows, align)), 2)
    tile = min(_round_up(pl.cdiv(rows, n_target), align), rows)
    return tile, pl.cdiv(rows, tile)


def edge_feature_mlp1_packed(x, params, *, slab_tile_rows=2048, out_dtype=None):
    n, d_in = x.shape
    assert d_in == params["d_in"]
    p = params["pack"]
    d_hidden, d_out = params["d_hidden"], params["d_out"]
    w1_bd, b1_bd = params["w1_bd"], params["b1_bd"]
    w2_bd, b2_bd = params["w2_bd"], params["b2_bd"]
    out_dt = out_dtype if out_dtype is not None else x.dtype

    # Pad only up to a multiple of P (needed for the free row-major slab
    # reshape); partial last grid blocks are handled by Pallas boundary masking.
    n_pad = _round_up(n, p)
    if n_pad != n:
        x = jnp.pad(x, ((0, n_pad - n), (0, 0)))
    rows = n_pad // p
    x_slab = x.reshape(rows, p * d_in)                 # free row-major reshape

    align = max(_sublane_rows(x.dtype), _sublane_rows(out_dt))
    tile_r, n_tiles = _pick_grid(rows, slab_tile_rows, align)

    exec_rows = n_tiles * tile_r                       # rows actually run on the MXU
    w_isz = jnp.dtype(w1_bd.dtype).itemsize
    cost = pl.CostEstimate(
        flops=2 * exec_rows * ((p * d_in) * (p * d_hidden)
                               + (p * d_hidden) * (p * d_out)),
        transcendentals=0,
        bytes_accessed=(x_slab.size * jnp.dtype(x.dtype).itemsize
                        + rows * p * d_out * jnp.dtype(out_dt).itemsize
                        + (w1_bd.size + w2_bd.size) * w_isz
                        + (b1_bd.size + b2_bd.size) * 4),
    )

    out = pl.pallas_call(
        _mlp_kernel,
        out_shape=jax.ShapeDtypeStruct((rows, p * d_out), out_dt),
        grid_spec=pltpu.PrefetchScalarGridSpec(
            num_scalar_prefetch=0,
            grid=(n_tiles,),
            in_specs=[
                pl.BlockSpec((tile_r, p * d_in), lambda i: (i, 0)),        # x (streamed)
                pl.BlockSpec((p * d_in, p * d_hidden), lambda i: (0, 0)),  # W1 (resident)
                pl.BlockSpec((1, p * d_hidden), lambda i: (0, 0)),         # b1
                pl.BlockSpec((p * d_hidden, p * d_out), lambda i: (0, 0)), # W2 (resident)
                pl.BlockSpec((1, p * d_out), lambda i: (0, 0)),            # b2
            ],
            out_specs=pl.BlockSpec((tile_r, p * d_out), lambda i: (i, 0)),
        ),
        compiler_params=pltpu.CompilerParams(
            dimension_semantics=("parallel",),        # shardable across v7x's 2 TCs
            vmem_limit_bytes=32 * 1024 * 1024,        # ~12 MiB used; safe on 64 MiB v7x
        ),
        cost_estimate=cost,
    )(x_slab, w1_bd, b1_bd, w2_bd, b2_bd)

    y = out.reshape(n_pad, d_out)                     # free row-major un-pack
    return y if n_pad == n else y[:n]


def make_edge_feature_mlp1(w1_t, b1, w2_t, b2, *, slab_tile_rows=2048,
                           compute_dtype=None, out_dtype=None):
    """Pack weights once and return a jitted apply(x).  The kron / bias-tile
    expansion is done here (weight-load time), not per forward call."""
    params = pack_edge_mlp1_params(w1_t, b1, w2_t, b2, compute_dtype=compute_dtype)

    @jax.jit
    def apply(x):
        return edge_feature_mlp1_packed(x, params,
                                        slab_tile_rows=slab_tile_rows,
                                        out_dtype=out_dtype)

    return apply


def edge_feature_mlp1(x, w1_t, b1, w2_t, b2, *, slab_tile_rows=2048,
                      compute_dtype=None, out_dtype=None):
    """One-shot convenience wrapper (prefer make_edge_feature_mlp1 in hot paths)."""
    params = pack_edge_mlp1_params(w1_t, b1, w2_t, b2, compute_dtype=compute_dtype)
    return edge_feature_mlp1_packed(x, params, slab_tile_rows=slab_tile_rows,
                                    out_dtype=out_dtype)


def _reference(x, w1_t, b1, w2_t, b2):
    return jnp.maximum(x @ w1_t + b1, 0.0) @ w2_t + b2


if __name__ == "__main__":
    INPUT_DIM, HIDDEN_DIM, OUTPUT_DIM = 16, 32, 8

    key = jax.random.PRNGKey(0)
    kx1, kx2, kw1, kb1, kw2, kb2 = jax.random.split(key, 6)

    # Parameters stored as (in, out) == PyTorch W.T.
    w1_t = jax.random.normal(kw1, (INPUT_DIM, HIDDEN_DIM), jnp.float32) * 0.1
    b1 = jax.random.normal(kb1, (HIDDEN_DIM,), jnp.float32) * 0.1
    w2_t = jax.random.normal(kw2, (HIDDEN_DIM, OUTPUT_DIM), jnp.float32) * 0.1
    b2 = jax.random.normal(kb2, (OUTPUT_DIM,), jnp.float32) * 0.1

    # 1) Small ragged N (not a multiple of the pack factor), single grid step,
    #    exact f32 semantics, weights packed once + jitted apply.
    N1 = 200
    x1 = jax.random.normal(kx1, (N1, INPUT_DIM), dtype=jnp.float32)
    apply_f32 = make_edge_feature_mlp1(w1_t, b1, w2_t, b2)
    y1 = jax.block_until_ready(apply_f32(x1))
    ref1 = _reference(x1, w1_t, b1, w2_t, b2)
    assert y1.shape == (N1, OUTPUT_DIM)
    assert jnp.allclose(y1, ref1, atol=1e-5, rtol=1e-5), "f32 mismatch"

    # 2) Larger ragged N with a forced multi-step grid (pipelined, partial last
    #    block, megacore-shardable path).
    N2 = 1000
    x2 = jax.random.normal(kx2, (N2, INPUT_DIM), dtype=jnp.float32)
    y2 = jax.block_until_ready(
        edge_feature_mlp1(x2, w1_t, b1, w2_t, b2, slab_tile_rows=16))
    ref2 = _reference(x2, w1_t, b1, w2_t, b2)
    assert y2.shape == (N2, OUTPUT_DIM)
    assert jnp.allclose(y2, ref2, atol=1e-5, rtol=1e-5), "multi-tile mismatch"

    # 3) bf16 MXU-operand path (f32 accumulate / bias / ReLU) — the recommended
    #    setting on v5e/v6e/v7x per the perf review; compared loosely vs f32.
    apply_bf16 = make_edge_feature_mlp1(w1_t, b1, w2_t, b2,
                                        compute_dtype=jnp.bfloat16)
    y3 = jax.block_until_ready(apply_bf16(x2))
    assert jnp.allclose(y3, ref2, atol=3e-2, rtol=3e-2), "bf16 mismatch"

    print("KERNEL_OK")
</pallas_src>

<mosaic_0001>
module attributes {stable_mosaic.version = 11 : i64} {
  func.func @_mlp_kernel(%arg0: i32, %arg1: memref<13x256xf32, #tpu.memory_space<vmem>>, %arg2: memref<256x512xf32, #tpu.memory_space<vmem>>, %arg3: memref<1x512xf32, #tpu.memory_space<vmem>>, %arg4: memref<512x128xf32, #tpu.memory_space<vmem>>, %arg5: memref<1x128xf32, #tpu.memory_space<vmem>>, %arg6: memref<13x128xf32, #tpu.memory_space<vmem>>) attributes {dimension_semantics = [#tpu.dimension_semantics<parallel>], iteration_bounds = array<i64: 1>, scalar_prefetch = 0 : i64, scratch_operands = 0 : i64, tpu.core_type = #tpu.core_type<tc>, window_params = [{transform_indices = @transform_0, window_bounds = array<i64: 13, 256>}, {pipeline_mode = #tpu.pipeline_mode<synchronous>, transform_indices = @transform_1, window_bounds = array<i64: 256, 512>}, {pipeline_mode = #tpu.pipeline_mode<synchronous>, transform_indices = @transform_2, window_bounds = array<i64: 1, 512>}, {pipeline_mode = #tpu.pipeline_mode<synchronous>, transform_indices = @transform_3, window_bounds = array<i64: 512, 128>}, {pipeline_mode = #tpu.pipeline_mode<synchronous>, transform_indices = @transform_4, window_bounds = array<i64: 1, 128>}, {transform_indices = @transform_5, window_bounds = array<i64: 13, 128>}]} {
    %c0 = arith.constant 0 : index
    %c0_0 = arith.constant 0 : index
    %0 = vector.load %arg1[%c0, %c0_0] : memref<13x256xf32, #tpu.memory_space<vmem>>, vector<13x256xf32>
    %c0_1 = arith.constant 0 : index
    %c0_2 = arith.constant 0 : index
    %1 = vector.load %arg2[%c0_1, %c0_2] : memref<256x512xf32, #tpu.memory_space<vmem>>, vector<256x512xf32>
    %cst = arith.constant dense<0.000000e+00> : vector<13x512xf32>
    %2 = tpu.matmul %0, %1, %cst {dimension_numbers = #tpu.dot_dimension_numbers<[1], [0], [0], [1], [0, 0, 1, 1], [], []>} : vector<13x256xf32>, vector<256x512xf32>, vector<13x512xf32> -> vector<13x512xf32>
    %c0_3 = arith.constant 0 : index
    %c0_4 = arith.constant 0 : index
    %3 = vector.load %arg3[%c0_3, %c0_4] : memref<1x512xf32, #tpu.memory_space<vmem>>, vector<1x512xf32>
    %4 = vector.broadcast %3 : vector<1x512xf32> to vector<13x512xf32>
    %5 = arith.addf %2, %4 : vector<13x512xf32>
    %cst_5 = arith.constant 0.000000e+00 : f32
    %6 = vector.broadcast %cst_5 : f32 to vector<13x512xf32>
    %7 = arith.maximumf %5, %6 : vector<13x512xf32>
    %c0_6 = arith.constant 0 : index
    %c0_7 = arith.constant 0 : index
    %8 = vector.load %arg4[%c0_6, %c0_7] : memref<512x128xf32, #tpu.memory_space<vmem>>, vector<512x128xf32>
    %cst_8 = arith.constant dense<0.000000e+00> : vector<13x128xf32>
    %9 = tpu.matmul %7, %8, %cst_8 {dimension_numbers = #tpu.dot_dimension_numbers<[1], [0], [0], [1], [0, 0, 1, 1], [], []>} : vector<13x512xf32>, vector<512x128xf32>, vector<13x128xf32> -> vector<13x128xf32>
    %c0_9 = arith.constant 0 : index
    %c0_10 = arith.constant 0 : index
    %10 = vector.load %arg5[%c0_9, %c0_10] : memref<1x128xf32, #tpu.memory_space<vmem>>, vector<1x128xf32>
    %11 = vector.broadcast %10 : vector<1x128xf32> to vector<13x128xf32>
    %12 = arith.addf %9, %11 : vector<13x128xf32>
    %c0_11 = arith.constant 0 : index
    %c0_12 = arith.constant 0 : index
    %13 = vector.load %arg6[%c0_11, %c0_12] : memref<13x128xf32, #tpu.memory_space<vmem>>, vector<13x128xf32>
    tpu.vector_store %arg6[%c0_11, %c0_12], %12 {strides = array<i32>} : memref<13x128xf32, #tpu.memory_space<vmem>>, vector<13x128xf32>,
    return
  }
  func.func @transform_0(%arg0: i32) -> (i32, i32) {
    %c0_i32 = arith.constant 0 : i32
    %c0_i32_0 = arith.constant 0 : i32
    return %arg0, %c0_i32 : i32, i32
  }
  func.func @transform_1(%arg0: i32) -> (i32, i32) {
    %c0_i32 = arith.constant 0 : i32
    %c0_i32_0 = arith.constant 0 : i32
    %c0_i32_1 = arith.constant 0 : i32
    return %c0_i32, %c0_i32_0 : i32, i32
  }
  func.func @transform_2(%arg0: i32) -> (i32, i32) {
    %c0_i32 = arith.constant 0 : i32
    %c0_i32_0 = arith.constant 0 : i32
    %c0_i32_1 = arith.constant 0 : i32
    return %c0_i32, %c0_i32_0 : i32, i32
  }
  func.func @transform_3(%arg0: i32) -> (i32, i32) {
    %c0_i32 = arith.constant 0 : i32
    %c0_i32_0 = arith.constant 0 : i32
    %c0_i32_1 = arith.constant 0 : i32
    return %c0_i32, %c0_i32_0 : i32, i32
  }
  func.func @transform_4(%arg0: i32) -> (i32, i32) {
    %c0_i32 = arith.constant 0 : i32
    %c0_i32_0 = arith.constant 0 : i32
    %c0_i32_1 = arith.constant 0 : i32
    return %c0_i32, %c0_i32_0 : i32, i32
  }
  func.func @transform_5(%arg0: i32) -> (i32, i32) {
    %c0_i32 = arith.constant 0 : i32
    %c0_i32_0 = arith.constant 0 : i32
    return %arg0, %c0_i32 : i32, i32
  }
}

</mosaic_0001>

<llo_original>
// kernel: apply.1
$region0: #{apply.1}
  #allocation0 [shape = 'u32[]', space=smem, size = 0x4, offset = 0x4, fixed_abs, tag = 'smem constant byte address 0x4 - core index']
  #allocation1 [shape = 'u32[144,128]{1,0:T(1,128)}', space=vmem, size = 0x12000, scoped, tag = 'internal scratch']
  %s0 = inlined_call_operand.vmem [shape: f32[13,256], index: 0, kind: input, shape index: {}]
  %s1 = inlined_call_operand.hbm [shape: f32[256,512], index: 1, kind: input, shape index: {}]
  %s2 = inlined_call_operand.vmem [shape: f32[1,512], index: 2, kind: input, shape index: {}]
  %s3 = inlined_call_operand.vmem [shape: f32[512,128], index: 3, kind: input, shape index: {}]
  %s4 = inlined_call_operand.vmem [shape: f32[1,128], index: 4, kind: input, shape index: {}]
  %s5 = inlined_call_operand.vmem [shape: f32[13,128], index: 5, kind: output, shape index: {}]
  %s6 = sld [smem:[#allocation0]]
  $region34: #{apply.1} parent=0
    _
  %s8 = ssub.s32 1, %s6
  %s9 = scalar_select 0, %s8, %s6
  $region1: #{apply.1} parent=0
    #allocation2 [shape = 'u8[524288]{0}', space=vmem, size = 0x80000, scoped, tag = 'input window, operand 1, single buffered']
    #allocation3 [shape = 's32[1]{0}', space=sflag, size = 0x4, scoped, tag = 'scoped memory for apply.1']
    %10 = vsyncpa [#allocation3], 0
    // Predicated region
    $region2: #{apply.1} parent=1 // pred_check
      _
    $region3: #{apply.1} parent=1 // pred_check_branch
      %12 = sbr.rel (0) target = $region5
    $region4: #{apply.1} parent=1 // pred_region
      _
    $region5: #{apply.1} parent=1 // pred_fallthru
      _
    // Predicated region
    $region6: #{apply.1} parent=1 // pred_check
      _
    $region7: #{apply.1} parent=1 // pred_check_branch
      %14 = sbr.rel (0) target = $region9
    $region8: #{apply.1} parent=1 // pred_region
      %s16 = ssub.s32 16384, 16384
      %17 = vsyncadd [#allocation3], %s16
      %s18 = sshll.u32 [#allocation2], 4
      %s19 = int_to_ptr.vmem [resolvable:$true] %s18
      %24 = dma.hbm_to_vmem [thread:$0]  %s1, 16384, %s19, [#allocation3], 512, 512, 32
    $region9: #{apply.1} parent=1 // pred_fallthru
      _
    // Predicated region
    $region10: #{apply.1} parent=1 // pred_check
      _
    $region11: #{apply.1} parent=1 // pred_check_branch
      %26 = sbr.rel (0) target = $region13
    $region12: #{apply.1} parent=1 // pred_region
      _
    $region13: #{apply.1} parent=1 // pred_fallthru
      _
    // Predicated region
    $region14: #{apply.1} parent=1 // pred_check
      _
    $region15: #{apply.1} parent=1 // pred_check_branch
      %28 = sbr.rel (0) target = $region17
    $region16: #{apply.1} parent=1 // pred_region
      _
    $region17: #{apply.1} parent=1 // pred_fallthru
      _
    // Predicated region
    $region18: #{apply.1} parent=1 // pred_check
      _
    $region19: #{apply.1} parent=1 // pred_check_branch
      %30 = sbr.rel (0) target = $region21
    $region20: #{apply.1} parent=1 // pred_region
      _
    $region21: #{apply.1} parent=1 // pred_fallthru
      _
    // Predicated region
    $region22: #{apply.1} parent=1 // pred_check
      _
    $region23: #{apply.1} parent=1 // pred_check_branch
      %32 = sbr.rel (0) target = $region25
    $region24: #{apply.1} parent=1 // pred_region
      %33 = dma.done [#allocation3], 16384
    $region25: #{apply.1} parent=1 // pred_fallthru
      _
    %v34 = vld [vmem:[%s0] sm:$0xff]
    %v35 = vld [vmem:[%s0 + $0x8] sm:$0xff]
    %v36 = vld [vmem:[%s0 + $0x10] sm:$0x1f]
    %v37 = vld [vmem:[%s0 + $0x18] sm:$0x1f]
    %v38 = vld [vmem:[#allocation2] sm:$0xff]
    %v39 = vld [vmem:[#allocation2 + $0x8] sm:$0xff]
    %v40 = vld [vmem:[#allocation2 + $0x10] sm:$0xff]
    %v41 = vld [vmem:[#allocation2 + $0x18] sm:$0xff]
    %v42 = vld [vmem:[#allocation2 + $0x20] sm:$0xff]
    %v43 = vld [vmem:[#allocation2 + $0x28] sm:$0xff]
    %v44 = vld [vmem:[#allocation2 + $0x30] sm:$0xff]
    %v45 = vld [vmem:[#allocation2 + $0x38] sm:$0xff]
    %v46 = vld [vmem:[#allocation2 + $0x40] sm:$0xff]
    %v47 = vld [vmem:[#allocation2 + $0x48] sm:$0xff]
    %v48 = vld [vmem:[#allocation2 + $0x50] sm:$0xff]
    %v49 = vld [vmem:[#allocation2 + $0x58] sm:$0xff]
    %v50 = vld [vmem:[#allocation2 + $0x60] sm:$0xff]
    %v51 = vld [vmem:[#allocation2 + $0x68] sm:$0xff]
    %v52 = vld [vmem:[#allocation2 + $0x70] sm:$0xff]
    %v53 = vld [vmem:[#allocation2 + $0x78] sm:$0xff]
    %v54 = vld [vmem:[#allocation2 + $0x80] sm:$0xff]
    %v55 = vld [vmem:[#allocation2 + $0x88] sm:$0xff]
    %v56 = vld [vmem:[#allocation2 + $0x90] sm:$0xff]
    %v57 = vld [vmem:[#allocation2 + $0x98] sm:$0xff]
    %v58 = vld [vmem:[#allocation2 + $0xa0] sm:$0xff]
    %v59 = vld [vmem:[#allocation2 + $0xa8] sm:$0xff]
    %v60 = vld [vmem:[#allocation2 + $0xb0] sm:$0xff]
    %v61 = vld [vmem:[#allocation2 + $0xb8] sm:$0xff]
    %v62 = vld [vmem:[#allocation2 + $0xc0] sm:$0xff]
    %v63 = vld [vmem:[#allocation2 + $0xc8] sm:$0xff]
    %v64 = vld [vmem:[#allocation2 + $0xd0] sm:$0xff]
    %v65 = vld [vmem:[#allocation2 + $0xd8] sm:$0xff]
    %v66 = vld [vmem:[#allocation2 + $0xe0] sm:$0xff]
    %v67 = vld [vmem:[#allocation2 + $0xe8] sm:$0xff]
    %v68 = vld [vmem:[#allocation2 + $0xf0] sm:$0xff]
    %v69 = vld [vmem:[#allocation2 + $0xf8] sm:$0xff]
    %v70 = vld [vmem:[#allocation2 + $0x100] sm:$0xff]
    %v71 = vld [vmem:[#allocation2 + $0x108] sm:$0xff]
    %v72 = vld [vmem:[#allocation2 + $0x110] sm:$0xff]
    %v73 = vld [vmem:[#allocation2 + $0x118] sm:$0xff]
    %v74 = vld [vmem:[#allocation2 + $0x120] sm:$0xff]
    %v75 = vld [vmem:[#allocation2 + $0x128] sm:$0xff]
    %v76 = vld [vmem:[#allocation2 + $0x130] sm:$0xff]
    %v77 = vld [vmem:[#allocation2 + $0x138] sm:$0xff]
    %v78 = vld [vmem:[#allocation2 + $0x140] sm:$0xff]
    %v79 = vld [vmem:[#allocation2 + $0x148] sm:$0xff]
    %v80 = vld [vmem:[#allocation2 + $0x150] sm:$0xff]
    %v81 = vld [vmem:[#allocation2 + $0x158] sm:$0xff]
    %v82 = vld [vmem:[#allocation2 + $0x160] sm:$0xff]
    %v83 = vld [vmem:[#allocation2 + $0x168] sm:$0xff]
    %v84 = vld [vmem:[#allocation2 + $0x170] sm:$0xff]
    %v85 = vld [vmem:[#allocation2 + $0x178] sm:$0xff]
    %v86 = vld [vmem:[#allocation2 + $0x180] sm:$0xff]
    %v87 = vld [vmem:[#allocation2 + $0x188] sm:$0xff]
    %v88 = vld [vmem:[#allocation2 + $0x190] sm:$0xff]
    %v89 = vld [vmem:[#allocation2 + $0x198] sm:$0xff]
    %v90 = vld [vmem:[#allocation2 + $0x1a0] sm:$0xff]
    %v91 = vld [vmem:[#allocation2 + $0x1a8] sm:$0xff]
    %v92 = vld [vmem:[#allocation2 + $0x1b0] sm:$0xff]
    %v93 = vld [vmem:[#allocation2 + $0x1b8] sm:$0xff]
    %v94 = vld [vmem:[#allocation2 + $0x1c0] sm:$0xff]
    %v95 = vld [vmem:[#allocation2 + $0x1c8] sm:$0xff]
    %v96 = vld [vmem:[#allocation2 + $0x1d0] sm:$0xff]
    %v97 = vld [vmem:[#allocation2 + $0x1d8] sm:$0xff]
    %v98 = vld [vmem:[#allocation2 + $0x1e0] sm:$0xff]
    %v99 = vld [vmem:[#allocation2 + $0x1e8] sm:$0xff]
    %v100 = vld [vmem:[#allocation2 + $0x1f0] sm:$0xff]
    %v101 = vld [vmem:[#allocation2 + $0x1f8] sm:$0xff]
    %v102 = vld [vmem:[#allocation2 + $0x200] sm:$0xff]
    %v103 = vld [vmem:[#allocation2 + $0x208] sm:$0xff]
    %v104 = vld [vmem:[#allocation2 + $0x210] sm:$0xff]
    %v105 = vld [vmem:[#allocation2 + $0x218] sm:$0xff]
    %v106 = vld [vmem:[#allocation2 + $0x220] sm:$0xff]
    %v107 = vld [vmem:[#allocation2 + $0x228] sm:$0xff]
    %v108 = vld [vmem:[#allocation2 + $0x230] sm:$0xff]
    %v109 = vld [vmem:[#allocation2 + $0x238] sm:$0xff]
    %v110 = vld [vmem:[#allocation2 + $0x240] sm:$0xff]
    %v111 = vld [vmem:[#allocation2 + $0x248] sm:$0xff]
    %v112 = vld [vmem:[#allocation2 + $0x250] sm:$0xff]
    %v113 = vld [vmem:[#allocation2 + $0x258] sm:$0xff]
    %v114 = vld [vmem:[#allocation2 + $0x260] sm:$0xff]
    %v115 = vld [vmem:[#allocation2 + $0x268] sm:$0xff]
    %v116 = vld [vmem:[#allocation2 + $0x270] sm:$0xff]
    %v117 = vld [vmem:[#allocation2 + $0x278] sm:$0xff]
    %v118 = vld [vmem:[#allocation2 + $0x280] sm:$0xff]
    %v119 = vld [vmem:[#allocation2 + $0x288] sm:$0xff]
    %v120 = vld [vmem:[#allocation2 + $0x290] sm:$0xff]
    %v121 = vld [vmem:[#allocation2 + $0x298] sm:$0xff]
    %v122 = vld [vmem:[#allocation2 + $0x2a0] sm:$0xff]
    %v123 = vld [vmem:[#allocation2 + $0x2a8] sm:$0xff]
    %v124 = vld [vmem:[#allocation2 + $0x2b0] sm:$0xff]
    %v125 = vld [vmem:[#allocation2 + $0x2b8] sm:$0xff]
    %v126 = vld [vmem:[#allocation2 + $0x2c0] sm:$0xff]
    %v127 = vld [vmem:[#allocation2 + $0x2c8] sm:$0xff]
    %v128 = vld [vmem:[#allocation2 + $0x2d0] sm:$0xff]
    %v129 = vld [vmem:[#allocation2 + $0x2d8] sm:$0xff]
    %v130 = vld [vmem:[#allocation2 + $0x2e0] sm:$0xff]
    %v131 = vld [vmem:[#allocation2 + $0x2e8] sm:$0xff]
    %v132 = vld [vmem:[#allocation2 + $0x2f0] sm:$0xff]
    %v133 = vld [vmem:[#allocation2 + $0x2f8] sm:$0xff]
    %v134 = vld [vmem:[#allocation2 + $0x300] sm:$0xff]
    %v135 = vld [vmem:[#allocation2 + $0x308] sm:$0xff]
    %v136 = vld [vmem:[#allocation2 + $0x310] sm:$0xff]
    %v137 = vld [vmem:[#allocation2 + $0x318] sm:$0xff]
    %v138 = vld [vmem:[#allocation2 + $0x320] sm:$0xff]
    %v139 = vld [vmem:[#allocation2 + $0x328] sm:$0xff]
    %v140 = vld [vmem:[#allocation2 + $0x330] sm:$0xff]
    %v141 = vld [vmem:[#allocation2 + $0x338] sm:$0xff]
    %v142 = vld [vmem:[#allocation2 + $0x340] sm:$0xff]
    %v143 = vld [vmem:[#allocation2 + $0x348] sm:$0xff]
    %v144 = vld [vmem:[#allocation2 + $0x350] sm:$0xff]
    %v145 = vld [vmem:[#allocation2 + $0x358] sm:$0xff]
    %v146 = vld [vmem:[#allocation2 + $0x360] sm:$0xff]
    %v147 = vld [vmem:[#allocation2 + $0x368] sm:$0xff]
    %v148 = vld [vmem:[#allocation2 + $0x370] sm:$0xff]
    %v149 = vld [vmem:[#allocation2 + $0x378] sm:$0xff]
    %v150 = vld [vmem:[#allocation2 + $0x380] sm:$0xff]
    %v151 = vld [vmem:[#allocation2 + $0x388] sm:$0xff]
    %v152 = vld [vmem:[#allocation2 + $0x390] sm:$0xff]
    %v153 = vld [vmem:[#allocation2 + $0x398] sm:$0xff]
    %v154 = vld [vmem:[#allocation2 + $0x3a0] sm:$0xff]
    %v155 = vld [vmem:[#allocation2 + $0x3a8] sm:$0xff]
    %v156 = vld [vmem:[#allocation2 + $0x3b0] sm:$0xff]
    %v157 = vld [vmem:[#allocation2 + $0x3b8] sm:$0xff]
    %v158 = vld [vmem:[#allocation2 + $0x3c0] sm:$0xff]
    %v159 = vld [vmem:[#allocation2 + $0x3c8] sm:$0xff]
    %v160 = vld [vmem:[#allocation2 + $0x3d0] sm:$0xff]
    %v161 = vld [vmem:[#allocation2 + $0x3d8] sm:$0xff]
    %v162 = vld [vmem:[#allocation2 + $0x3e0] sm:$0xff]
    %v163 = vld [vmem:[#allocation2 + $0x3e8] sm:$0xff]
    %v164 = vld [vmem:[#allocation2 + $0x3f0] sm:$0xff]
    %v165 = vld [vmem:[#allocation2 + $0x3f8] sm:$0xff]
    %v166 = vld [vmem:[%s2] sm:$0xf]
    %v168 = vlaneseq
    %v169 = vshrl.u32 %v168, 7
    %v170 = vsub.s32 0, %v169
    %v171 = vrot.slane %v166, %v170
    %v172 = vlaneseq
    %v173 = vshrl.u32 %v172, 7
    %v174 = vsub.s32 1, %v173
    %v175 = vrot.slane %v166, %v174
    %v176 = vlaneseq
    %v177 = vshrl.u32 %v176, 7
    %v178 = vsub.s32 2, %v177
    %v179 = vrot.slane %v166, %v178
    %v180 = vlaneseq
    %v181 = vshrl.u32 %v180, 7
    %v182 = vsub.s32 3, %v181
    %v183 = vrot.slane %v166, %v182
    %188 = vmatprep.subr.mxu0 %v39
    %189 = vmatpush1.msra.mxu0 %v38
    %190 = vmatprep.subr.mxu0 %v43
    %191 = vmatpush1.msra.mxu0 %v42
    %192 = vmatprep.subr.mxu0 %v47
    %193 = vmatpush1.msra.mxu0 %v46
    %194 = vmatprep.subr.mxu0 %v51
    %195 = vmatpush1.msra.mxu0 %v50
    %196 = vmatprep.subr.mxu0 %v55
    %197 = vmatpush1.msra.mxu0 %v54
    %198 = vmatprep.subr.mxu0 %v59
    %199 = vmatpush1.msra.mxu0 %v58
    %200 = vmatprep.subr.mxu0 %v63
    %201 = vmatpush1.msra.mxu0 %v62
    %202 = vmatprep.subr.mxu0 %v67
    %203 = vmatpush1.msra.mxu0 %v66
    %204 = vmatprep.subr.mxu0 %v71
    %205 = vmatpush1.msra.mxu0 %v70
    %206 = vmatprep.subr.mxu0 %v75
    %207 = vmatpush1.msra.mxu0 %v74
    %208 = vmatprep.subr.mxu0 %v79
    %209 = vmatpush1.msra.mxu0 %v78
    %210 = vmatprep.subr.mxu0 %v83
    %211 = vmatpush1.msra.mxu0 %v82
    %212 = vmatprep.subr.mxu0 %v87
    %213 = vmatpush1.msra.mxu0 %v86
    %214 = vmatprep.subr.mxu0 %v91
    %215 = vmatpush1.msra.mxu0 %v90
    %216 = vmatprep.subr.mxu0 %v95
    %217 = vmatpush1.msra.mxu0 %v94
    %218 = vmatprep.subr.mxu0 %v99
    %219 = vmatpush1.msra.mxu0 %v98
    %220 = vmatprep.subr.mxu0 %v103
    %221 = vmatpush1.msra.mxu0 %v102
    %222 = vmatprep.subr.mxu0 %v107
    %223 = vmatpush1.msra.mxu0 %v106
    %224 = vmatprep.subr.mxu0 %v111
    %225 = vmatpush1.msra.mxu0 %v110
    %226 = vmatprep.subr.mxu0 %v115
    %227 = vmatpush1.msra.mxu0 %v114
    %228 = vmatprep.subr.mxu0 %v119
    %229 = vmatpush1.msra.mxu0 %v118
    %230 = vmatprep.subr.mxu0 %v123
    %231 = vmatpush1.msra.mxu0 %v122
    %232 = vmatprep.subr.mxu0 %v127
    %233 = vmatpush1.msra.mxu0 %v126
    %234 = vmatprep.subr.mxu0 %v131
    %235 = vmatpush1.msra.mxu0 %v130
    %236 = vmatprep.subr.mxu0 %v135
    %237 = vmatpush1.msra.mxu0 %v134
    %238 = vmatprep.subr.mxu0 %v139
    %239 = vmatpush1.msra.mxu0 %v138
    %240 = vmatprep.subr.mxu0 %v143
    %241 = vmatpush1.msra.mxu0 %v142
    %242 = vmatprep.subr.mxu0 %v147
    %243 = vmatpush1.msra.mxu0 %v146
    %244 = vmatprep.subr.mxu0 %v151
    %245 = vmatpush1.msra.mxu0 %v150
    %246 = vmatprep.subr.mxu0 %v155
    %247 = vmatpush1.msra.mxu0 %v154
    %248 = vmatprep.subr.mxu0 %v159
    %249 = vmatpush1.msra.mxu0 %v158
    %250 = vmatprep.subr.mxu0 %v163
    %251 = vmatpush1.msra.mxu0 %v162
    %252 = vmatprep.mubr.f32.mxu0 %v35
    %253 = vmatmul.mubr.f32.gmra.mrb[0].mxu0 %v34
    %v254 = vpop.f32.mrb[0].mxu0
    %v255 = vadd.f32 %v171, %v254
    %v256 = vpop.f32.mrb[0].mxu0
    %v257 = vadd.f32 %v175, %v256
    %258 = vmatprep.mubr.f32.mxu0 %v37
    %259 = vmatmul.mubr.f32.gmra.mrb[0].mxu0 %v36
    %v260 = vpop.f32.mrb[0].mxu0
    %v261 = vadd.f32 %v171, %v260
    %v262 = vpop.f32.mrb[0].mxu0
    %v263 = vadd.f32 %v175, %v262
    %264 = vdwg.mxu0
    %265 = vmatprep.subr.mxu0 %v41
    %266 = vmatpush1.msra.mxu0 %v40
    %267 = vmatprep.subr.mxu0 %v45
    %268 = vmatpush1.msra.mxu0 %v44
    %269 = vmatprep.subr.mxu0 %v49
    %270 = vmatpush1.msra.mxu0 %v48
    %271 = vmatprep.subr.mxu0 %v53
    %272 = vmatpush1.msra.mxu0 %v52
    %273 = vmatprep.subr.mxu0 %v57
    %274 = vmatpush1.msra.mxu0 %v56
    %275 = vmatprep.subr.mxu0 %v61
    %276 = vmatpush1.msra.mxu0 %v60
    %277 = vmatprep.subr.mxu0 %v65
    %278 = vmatpush1.msra.mxu0 %v64
    %279 = vmatprep.subr.mxu0 %v69
    %280 = vmatpush1.msra.mxu0 %v68
    %281 = vmatprep.subr.mxu0 %v73
    %282 = vmatpush1.msra.mxu0 %v72
    %283 = vmatprep.subr.mxu0 %v77
    %284 = vmatpush1.msra.mxu0 %v76
    %285 = vmatprep.subr.mxu0 %v81
    %286 = vmatpush1.msra.mxu0 %v80
    %287 = vmatprep.subr.mxu0 %v85
    %288 = vmatpush1.msra.mxu0 %v84
    %289 = vmatprep.subr.mxu0 %v89
    %290 = vmatpush1.msra.mxu0 %v88
    %291 = vmatprep.subr.mxu0 %v93
    %292 = vmatpush1.msra.mxu0 %v92
    %293 = vmatprep.subr.mxu0 %v97
    %294 = vmatpush1.msra.mxu0 %v96
    %295 = vmatprep.subr.mxu0 %v101
    %296 = vmatpush1.msra.mxu0 %v100
    %297 = vmatprep.subr.mxu0 %v105
    %298 = vmatpush1.msra.mxu0 %v104
    %299 = vmatprep.subr.mxu0 %v109
    %300 = vmatpush1.msra.mxu0 %v108
    %301 = vmatprep.subr.mxu0 %v113
    %302 = vmatpush1.msra.mxu0 %v112
    %303 = vmatprep.subr.mxu0 %v117
    %304 = vmatpush1.msra.mxu0 %v116
    %305 = vmatprep.subr.mxu0 %v121
    %306 = vmatpush1.msra.mxu0 %v120
    %307 = vmatprep.subr.mxu0 %v125
    %308 = vmatpush1.msra.mxu0 %v124
    %309 = vmatprep.subr.mxu0 %v129
    %310 = vmatpush1.msra.mxu0 %v128
    %311 = vmatprep.subr.mxu0 %v133
    %312 = vmatpush1.msra.mxu0 %v132
    %313 = vmatprep.subr.mxu0 %v137
    %314 = vmatpush1.msra.mxu0 %v136
    %315 = vmatprep.subr.mxu0 %v141
    %316 = vmatpush1.msra.mxu0 %v140
    %317 = vmatprep.subr.mxu0 %v145
    %318 = vmatpush1.msra.mxu0 %v144
    %319 = vmatprep.subr.mxu0 %v149
    %320 = vmatpush1.msra.mxu0 %v148
    %321 = vmatprep.subr.mxu0 %v153
    %322 = vmatpush1.msra.mxu0 %v152
    %323 = vmatprep.subr.mxu0 %v157
    %324 = vmatpush1.msra.mxu0 %v156
    %325 = vmatprep.subr.mxu0 %v161
    %326 = vmatpush1.msra.mxu0 %v160
    %327 = vmatprep.subr.mxu0 %v165
    %328 = vmatpush1.msra.mxu0 %v164
    %329 = vmatprep.mubr.f32.mxu0 %v35
    %330 = vmatmul.mubr.f32.gmra.mrb[0].mxu0 %v34
    %v331 = vpop.f32.mrb[0].mxu0
    %v332 = vadd.f32 %v179, %v331
    %v333 = vpop.f32.mrb[0].mxu0
    %v334 = vadd.f32 %v183, %v333
    %335 = vmatprep.mubr.f32.mxu0 %v37
    %336 = vmatmul.mubr.f32.gmra.mrb[0].mxu0 %v36
    %v337 = vpop.f32.mrb[0].mxu0
    %v338 = vadd.f32 %v179, %v337
    %v339 = vpop.f32.mrb[0].mxu0
    %v340 = vadd.f32 %v183, %v339
    %341 = vdwg.mxu0
    %v342 = vmax.f32 %v255, 0.0
    %v343 = vmax.f32 %v257, 0.0
    %v344 = vmax.f32 %v332, 0.0
    %v345 = vmax.f32 %v334, 0.0
    %v346 = vmax.f32 %v261, 0.0
    %v347 = vmax.f32 %v263, 0.0
    %v348 = vmax.f32 %v338, 0.0
    %v349 = vmax.f32 %v340, 0.0
    %v350 = vld [vmem:[%s3] sm:$0xff]
    %v351 = vld [vmem:[%s3 + $0x8] sm:$0xff]
    %v352 = vld [vmem:[%s3 + $0x10] sm:$0xff]
    %v353 = vld [vmem:[%s3 + $0x18] sm:$0xff]
    %v354 = vld [vmem:[%s3 + $0x20] sm:$0xff]
    %v355 = vld [vmem:[%s3 + $0x28] sm:$0xff]
    %v356 = vld [vmem:[%s3 + $0x30] sm:$0xff]
    %v357 = vld [vmem:[%s3 + $0x38] sm:$0xff]
    %v358 = vld [vmem:[%s3 + $0x40] sm:$0xff]
    %v359 = vld [vmem:[%s3 + $0x48] sm:$0xff]
    %v360 = vld [vmem:[%s3 + $0x50] sm:$0xff]
    %v361 = vld [vmem:[%s3 + $0x58] sm:$0xff]
    %v362 = vld [vmem:[%s3 + $0x60] sm:$0xff]
    %v363 = vld [vmem:[%s3 + $0x68] sm:$0xff]
    %v364 = vld [vmem:[%s3 + $0x70] sm:$0xff]
    %v365 = vld [vmem:[%s3 + $0x78] sm:$0xff]
    %v366 = vld [vmem:[%s3 + $0x80] sm:$0xff]
    %v367 = vld [vmem:[%s3 + $0x88] sm:$0xff]
    %v368 = vld [vmem:[%s3 + $0x90] sm:$0xff]
    %v369 = vld [vmem:[%s3 + $0x98] sm:$0xff]
    %v370 = vld [vmem:[%s3 + $0xa0] sm:$0xff]
    %v371 = vld [vmem:[%s3 + $0xa8] sm:$0xff]
    %v372 = vld [vmem:[%s3 + $0xb0] sm:$0xff]
    %v373 = vld [vmem:[%s3 + $0xb8] sm:$0xff]
    %v374 = vld [vmem:[%s3 + $0xc0] sm:$0xff]
    %v375 = vld [vmem:[%s3 + $0xc8] sm:$0xff]
    %v376 = vld [vmem:[%s3 + $0xd0] sm:$0xff]
    %v377 = vld [vmem:[%s3 + $0xd8] sm:$0xff]
    %v378 = vld [vmem:[%s3 + $0xe0] sm:$0xff]
    %v379 = vld [vmem:[%s3 + $0xe8] sm:$0xff]
    %v380 = vld [vmem:[%s3 + $0xf0] sm:$0xff]
    %v381 = vld [vmem:[%s3 + $0xf8] sm:$0xff]
    %v382 = vld [vmem:[%s3 + $0x100] sm:$0xff]
    %v383 = vld [vmem:[%s3 + $0x108] sm:$0xff]
    %v384 = vld [vmem:[%s3 + $0x110] sm:$0xff]
    %v385 = vld [vmem:[%s3 + $0x118] sm:$0xff]
    %v386 = vld [vmem:[%s3 + $0x120] sm:$0xff]
    %v387 = vld [vmem:[%s3 + $0x128] sm:$0xff]
    %v388 = vld [vmem:[%s3 + $0x130] sm:$0xff]
    %v389 = vld [vmem:[%s3 + $0x138] sm:$0xff]
    %v390 = vld [vmem:[%s3 + $0x140] sm:$0xff]
    %v391 = vld [vmem:[%s3 + $0x148] sm:$0xff]
    %v392 = vld [vmem:[%s3 + $0x150] sm:$0xff]
    %v393 = vld [vmem:[%s3 + $0x158] sm:$0xff]
    %v394 = vld [vmem:[%s3 + $0x160] sm:$0xff]
    %v395 = vld [vmem:[%s3 + $0x168] sm:$0xff]
    %v396 = vld [vmem:[%s3 + $0x170] sm:$0xff]
    %v397 = vld [vmem:[%s3 + $0x178] sm:$0xff]
    %v398 = vld [vmem:[%s3 + $0x180] sm:$0xff]
    %v399 = vld [vmem:[%s3 + $0x188] sm:$0xff]
    %v400 = vld [vmem:[%s3 + $0x190] sm:$0xff]
    %v401 = vld [vmem:[%s3 + $0x198] sm:$0xff]
    %v402 = vld [vmem:[%s3 + $0x1a0] sm:$0xff]
    %v403 = vld [vmem:[%s3 + $0x1a8] sm:$0xff]
    %v404 = vld [vmem:[%s3 + $0x1b0] sm:$0xff]
    %v405 = vld [vmem:[%s3 + $0x1b8] sm:$0xff]
    %v406 = vld [vmem:[%s3 + $0x1c0] sm:$0xff]
    %v407 = vld [vmem:[%s3 + $0x1c8] sm:$0xff]
    %v408 = vld [vmem:[%s3 + $0x1d0] sm:$0xff]
    %v409 = vld [vmem:[%s3 + $0x1d8] sm:$0xff]
    %v410 = vld [vmem:[%s3 + $0x1e0] sm:$0xff]
    %v411 = vld [vmem:[%s3 + $0x1e8] sm:$0xff]
    %v412 = vld [vmem:[%s3 + $0x1f0] sm:$0xff]
    %v413 = vld [vmem:[%s3 + $0x1f8] sm:$0xff]
    %v414 = vld [vmem:[%s4] sm:$0x1]
    %v416 = vlaneseq
    %v417 = vshrl.u32 %v416, 7
    %v418 = vsub.s32 0, %v417
    %v419 = vrot.slane %v414, %v418
    %421 = vmatprep.subr.mxu0 0.0
    %422 = vmatpush1.msra.mxu0 %v350
    %423 = vmatprep.subr.mxu0 0.0
    %424 = vmatpush1.msra.mxu0 %v351
    %425 = vmatprep.subr.mxu0 0.0
    %426 = vmatpush1.msra.mxu0 %v352
    %427 = vmatprep.subr.mxu0 0.0
    %428 = vmatpush1.msra.mxu0 %v353
    %429 = vmatprep.subr.mxu0 0.0
    %430 = vmatpush1.msra.mxu0 %v354
    %431 = vmatprep.subr.mxu0 0.0
    %432 = vmatpush1.msra.mxu0 %v355
    %433 = vmatprep.subr.mxu0 0.0
    %434 = vmatpush1.msra.mxu0 %v356
    %435 = vmatprep.subr.mxu0 0.0
    %436 = vmatpush1.msra.mxu0 %v357
    %437 = vmatprep.subr.mxu0 0.0
    %438 = vmatpush1.msra.mxu0 %v358
    %439 = vmatprep.subr.mxu0 0.0
    %440 = vmatpush1.msra.mxu0 %v359
    %441 = vmatprep.subr.mxu0 0.0
    %442 = vmatpush1.msra.mxu0 %v360
    %443 = vmatprep.subr.mxu0 0.0
    %444 = vmatpush1.msra.mxu0 %v361
    %445 = vmatprep.subr.mxu0 0.0
    %446 = vmatpush1.msra.mxu0 %v362
    %447 = vmatprep.subr.mxu0 0.0
    %448 = vmatpush1.msra.mxu0 %v363
    %449 = vmatprep.subr.mxu0 0.0
    %450 = vmatpush1.msra.mxu0 %v364
    %451 = vmatprep.subr.mxu0 0.0
    %452 = vmatpush1.msra.mxu0 %v365
    %453 = vmatprep.subr.mxu0 0.0
    %454 = vmatpush1.msra.mxu0 %v366
    %455 = vmatprep.subr.mxu0 0.0
    %456 = vmatpush1.msra.mxu0 %v367
    %457 = vmatprep.subr.mxu0 0.0
    %458 = vmatpush1.msra.mxu0 %v368
    %459 = vmatprep.subr.mxu0 0.0
    %460 = vmatpush1.msra.mxu0 %v369
    %461 = vmatprep.subr.mxu0 0.0
    %462 = vmatpush1.msra.mxu0 %v370
    %463 = vmatprep.subr.mxu0 0.0
    %464 = vmatpush1.msra.mxu0 %v371
    %465 = vmatprep.subr.mxu0 0.0
    %466 = vmatpush1.msra.mxu0 %v372
    %467 = vmatprep.subr.mxu0 0.0
    %468 = vmatpush1.msra.mxu0 %v373
    %469 = vmatprep.subr.mxu0 0.0
    %470 = vmatpush1.msra.mxu0 %v374
    %471 = vmatprep.subr.mxu0 0.0
    %472 = vmatpush1.msra.mxu0 %v375
    %473 = vmatprep.subr.mxu0 0.0
    %474 = vmatpush1.msra.mxu0 %v376
    %475 = vmatprep.subr.mxu0 0.0
    %476 = vmatpush1.msra.mxu0 %v377
    %477 = vmatprep.subr.mxu0 0.0
    %478 = vmatpush1.msra.mxu0 %v378
    %479 = vmatprep.subr.mxu0 0.0
    %480 = vmatpush1.msra.mxu0 %v379
    %481 = vmatprep.subr.mxu0 0.0
    %482 = vmatpush1.msra.mxu0 %v380
    %483 = vmatprep.subr.mxu0 0.0
    %484 = vmatpush1.msra.mxu0 %v381
    %485 = vmatprep.mubr.f32.mxu0 %v343
    %486 = vmatmul.mubr.f32.gmra.mrb[0].mxu0 %v342
    %v487 = vpop.f32.mrb[0].mxu0
    %v488 = vadd.f32 %v419, %v487
    %v489 = vpop.f32.mrb[0].mxu0
    %490 = vmatprep.mubr.f32.mxu0 %v347
    %491 = vmatmul.mubr.f32.gmra.mrb[0].mxu0 %v346
    %v492 = vpop.f32.mrb[0].mxu0
    %v493 = vadd.f32 %v419, %v492
    %v494 = vpop.f32.mrb[0].mxu0
    %495 = vdwg.mxu0
    %496 = vmatprep.subr.mxu0 0.0
    %497 = vmatpush1.msra.mxu0 %v382
    %498 = vmatprep.subr.mxu0 0.0
    %499 = vmatpush1.msra.mxu0 %v383
    %500 = vmatprep.subr.mxu0 0.0
    %501 = vmatpush1.msra.mxu0 %v384
    %502 = vmatprep.subr.mxu0 0.0
    %503 = vmatpush1.msra.mxu0 %v385
    %504 = vmatprep.subr.mxu0 0.0
    %505 = vmatpush1.msra.mxu0 %v386
    %506 = vmatprep.subr.mxu0 0.0
    %507 = vmatpush1.msra.mxu0 %v387
    %508 = vmatprep.subr.mxu0 0.0
    %509 = vmatpush1.msra.mxu0 %v388
    %510 = vmatprep.subr.mxu0 0.0
    %511 = vmatpush1.msra.mxu0 %v389
    %512 = vmatprep.subr.mxu0 0.0
    %513 = vmatpush1.msra.mxu0 %v390
    %514 = vmatprep.subr.mxu0 0.0
    %515 = vmatpush1.msra.mxu0 %v391
    %516 = vmatprep.subr.mxu0 0.0
    %517 = vmatpush1.msra.mxu0 %v392
    %518 = vmatprep.subr.mxu0 0.0
    %519 = vmatpush1.msra.mxu0 %v393
    %520 = vmatprep.subr.mxu0 0.0
    %521 = vmatpush1.msra.mxu0 %v394
    %522 = vmatprep.subr.mxu0 0.0
    %523 = vmatpush1.msra.mxu0 %v395
    %524 = vmatprep.subr.mxu0 0.0
    %525 = vmatpush1.msra.mxu0 %v396
    %526 = vmatprep.subr.mxu0 0.0
    %527 = vmatpush1.msra.mxu0 %v397
    %528 = vmatprep.subr.mxu0 0.0
    %529 = vmatpush1.msra.mxu0 %v398
    %530 = vmatprep.subr.mxu0 0.0
    %531 = vmatpush1.msra.mxu0 %v399
    %532 = vmatprep.subr.mxu0 0.0
    %533 = vmatpush1.msra.mxu0 %v400
    %534 = vmatprep.subr.mxu0 0.0
    %535 = vmatpush1.msra.mxu0 %v401
    %536 = vmatprep.subr.mxu0 0.0
    %537 = vmatpush1.msra.mxu0 %v402
    %538 = vmatprep.subr.mxu0 0.0
    %539 = vmatpush1.msra.mxu0 %v403
    %540 = vmatprep.subr.mxu0 0.0
    %541 = vmatpush1.msra.mxu0 %v404
    %542 = vmatprep.subr.mxu0 0.0
    %543 = vmatpush1.msra.mxu0 %v405
    %544 = vmatprep.subr.mxu0 0.0
    %545 = vmatpush1.msra.mxu0 %v406
    %546 = vmatprep.subr.mxu0 0.0
    %547 = vmatpush1.msra.mxu0 %v407
    %548 = vmatprep.subr.mxu0 0.0
    %549 = vmatpush1.msra.mxu0 %v408
    %550 = vmatprep.subr.mxu0 0.0
    %551 = vmatpush1.msra.mxu0 %v409
    %552 = vmatprep.subr.mxu0 0.0
    %553 = vmatpush1.msra.mxu0 %v410
    %554 = vmatprep.subr.mxu0 0.0
    %555 = vmatpush1.msra.mxu0 %v411
    %556 = vmatprep.subr.mxu0 0.0
    %557 = vmatpush1.msra.mxu0 %v412
    %558 = vmatprep.subr.mxu0 0.0
    %559 = vmatpush1.msra.mxu0 %v413
    %560 = vmatprep.mubr.f32.mxu0 %v345
    %561 = vmatmul.mubr.f32.gmra.mrb[0].mxu0 %v344
    %v562 = vpop.f32.mrb[0].mxu0
    %v563 = vadd.f32 %v488, %v562
    %v564 = vpop.f32.mrb[0].mxu0
    %565 = vmatprep.mubr.f32.mxu0 %v349
    %566 = vmatmul.mubr.f32.gmra.mrb[0].mxu0 %v348
    %v567 = vpop.f32.mrb[0].mxu0
    %v568 = vadd.f32 %v493, %v567
    %v569 = vpop.f32.mrb[0].mxu0
    %570 = vdwg.mxu0
    %571 = vst [vmem:[%s5] sm:$0xff] %v563
    %572 = vst [vmem:[%s5 + $0x8] sm:$0x1f] %v568
    // Predicated region
    $region26: #{apply.1} parent=1 // pred_check
      _
    $region27: #{apply.1} parent=1 // pred_check_branch
      %574 = sbr.rel (0) target = $region29
    $region28: #{apply.1} parent=1 // pred_region
      _
    $region29: #{apply.1} parent=1 // pred_fallthru
      _
    // Predicated region
    $region30: #{apply.1} parent=1 // pred_check
      _
    $region31: #{apply.1} parent=1 // pred_check_branch
      %576 = sbr.rel (0) target = $region33
    $region32: #{apply.1} parent=1 // pred_region
      _
    $region33: #{apply.1} parent=1 // pred_fallthru
      _
    %577 = vsyncpa [#allocation3], 1

</llo_original>
